<compile_context>
chip_gen: v5e
topology: v5e:2x2
jax: 0.10.0
libtpu: 0.0.40
codegen_flags: <defaults>
</compile_context>

<pallas_src>
import jax
import jax.numpy as jnp
from jax import lax
from jax.experimental import pallas as pl
from jax.experimental.pallas import tpu as pltpu

LN_EPS = 1e-12


# ----------------------------------------------------------------------------- kernel
def bert_att_output_kernel(x_ref, res_ref, w_ref, p_ref, o_ref):
    # x_ref, res_ref, o_ref : (tm, H)
    # w_ref                 : (H, H) pre-transposed (in, out), typically bf16
    # p_ref                 : (3, H) rows = [dense bias, LN gamma, LN beta], f32
    w = w_ref[...]
    # Feed the MXU in the weight's (narrow) dtype; accumulate in f32.
    h = jnp.dot(x_ref[...].astype(w.dtype), w, preferred_element_type=jnp.float32)

    params = p_ref[...].astype(jnp.float32)
    bias = params[0:1, :]
    gamma = params[1:2, :]
    beta = params[2:3, :]

    # Dropout is identity at inference.  Bias + residual add in f32.
    y = h + bias + res_ref[...].astype(jnp.float32)

    # LayerNorm over the hidden axis, statistics in f32, eps = 1e-12.
    mean = jnp.mean(y, axis=-1, keepdims=True)
    centered = y - mean
    var = jnp.mean(centered * centered, axis=-1, keepdims=True)
    y_norm = centered * lax.rsqrt(var + LN_EPS)

    o_ref[...] = (y_norm * gamma + beta).astype(o_ref.dtype)


# ----------------------------------------------------------------------------- packing
def prepack_params(weight, bias, gamma, beta, *, weight_dtype=jnp.bfloat16):
    """One-time (model-load) packing: transpose torch (out,in) weight to (in,out)
    in a narrow MXU-friendly dtype; stack bias/gamma/beta into one (3,H) f32."""
    w_t = jnp.asarray(weight).T
    if weight_dtype is not None:
        w_t = w_t.astype(weight_dtype)
    params = jnp.stack(
        [jnp.asarray(bias), jnp.asarray(gamma), jnp.asarray(beta)], axis=0
    ).astype(jnp.float32)
    return w_t, params


# ----------------------------------------------------------------------------- tiling
def _round_up(x, m):
    return ((x + m - 1) // m) * m


def _sublane(dtype):
    # Native sublane multiple: 8 for f32, 16 for bf16, 32 for int8/fp8.
    itemsize = jnp.dtype(dtype).itemsize
    return max(8, 32 // max(1, itemsize))


def _vmem_capacity_bytes():
    try:
        info = pltpu.get_tpu_info()
        for attr in ("vmem_capacity_bytes", "vmem_size_bytes", "vmem_bytes"):
            v = getattr(info, attr, None)
            if v:
                return int(v)
    except Exception:
        pass
    return 64 * 1024 * 1024  # conservative default: v7x per-TensorCore VMEM


def _choose_tm(M, H, act_itemsize, w_itemsize, sublane, vmem_cap):
    """Row tile: as large as the VMEM budget allows (amortizes the ~0.35us/step
    pipeline overhead), a dtype-native sublane multiple, and small enough that
    the grid has >= 2 blocks so a 2-TensorCore chip (v7x) shards the work."""
    m_up = _round_up(max(int(M), 1), sublane)
    budget = min(int(vmem_cap * 0.55), 96 * 1024 * 1024)
    w_bytes = 2 * H * H * w_itemsize                # conservative (double-buffered)
    per_row = (3 * 2 * H * act_itemsize             # x, res, out (double-buffered)
               + H * w_itemsize                     # in-kernel cast copy of x tile
               + 5 * H * 4)                         # f32 matmul acc + LN temporaries
    rows = (budget - w_bytes) // per_row if budget > w_bytes else sublane
    tm_max = max(sublane, (min(2048, int(rows)) // sublane) * sublane)
    # Aim for >= 2 grid blocks whenever M allows it (keeps both v7x TCs busy).
    tm_target = _round_up(pl.cdiv(m_up, 2), sublane) if m_up > sublane else m_up
    tm = max(sublane, min(tm_target, tm_max))
    if tm >= 512:
        tm = (tm // 256) * 256                      # MXU-friendly large tiles
    return tm


def _vmem_limit_bytes(tm, H, act_itemsize, w_itemsize, vmem_cap):
    act = 3 * 2 * tm * H * act_itemsize             # x, res, out double-buffered
    wgt = 2 * H * H * w_itemsize                    # weight (worst-case double-buffered)
    cast = tm * H * w_itemsize                      # bf16 copy of x fed to the MXU
    ln_tmp = 5 * tm * H * 4                         # f32 h / y / centered intermediates
    prm = 2 * 3 * H * 4
    est = act + wgt + cast + ln_tmp + prm + (4 << 20)   # + compiler scratch headroom
    cap = max(32 * 1024 * 1024, min(int(vmem_cap) - (16 << 20), 100 * 1024 * 1024))
    return int(min(max(est * 5 // 4, 32 * 1024 * 1024), cap))


# ----------------------------------------------------------------------------- wrapper
def _pallas_forward(x2d, r2d, weight_t, params, *, tm, vmem_limit, single_buffer):
    M, H = x2d.shape
    if single_buffer:
        # Grid-invariant operands: single-buffer to save VMEM (real money on v7x).
        w_spec = pl.BlockSpec((H, H), lambda i: (0, 0), pipeline_mode=pl.Buffered(1))
        p_spec = pl.BlockSpec((3, H), lambda i: (0, 0), pipeline_mode=pl.Buffered(1))
    else:
        w_spec = pl.BlockSpec((H, H), lambda i: (0, 0))
        p_spec = pl.BlockSpec((3, H), lambda i: (0, 0))

    return pl.pallas_call(
        bert_att_output_kernel,
        out_shape=jax.ShapeDtypeStruct((M, H), x2d.dtype),
        grid_spec=pltpu.PrefetchScalarGridSpec(
            num_scalar_prefetch=0,
            grid=(pl.cdiv(M, tm),),            # ragged last block; OOB writes dropped
            in_specs=[
                pl.BlockSpec((tm, H), lambda i: (i, 0)),   # hidden_states rows
                pl.BlockSpec((tm, H), lambda i: (i, 0)),   # residual rows
                w_spec,                                     # dense weight (resident)
                p_spec,                                     # [bias, gamma, beta]
            ],
            out_specs=pl.BlockSpec((tm, H), lambda i: (i, 0)),
        ),
        compiler_params=pltpu.CompilerParams(
            dimension_semantics=("parallel",),
            vmem_limit_bytes=vmem_limit,
        ),
    )(x2d, r2d, weight_t, params)


def bert_att_output(hidden_states, input_tensor, weight_t, params, *, tm=None):
    """hidden_states, input_tensor: [B, S, H].
    weight_t: [H, H] pre-transposed (in, out).  params: [3, H] = [bias, gamma, beta]."""
    B, S, H = hidden_states.shape
    M = B * S

    act_itemsize = jnp.dtype(hidden_states.dtype).itemsize
    w_itemsize = jnp.dtype(weight_t.dtype).itemsize
    sublane = _sublane(hidden_states.dtype)
    vmem_cap = _vmem_capacity_bytes()
    if tm is None:
        tm = _choose_tm(M, H, act_itemsize, w_itemsize, sublane, vmem_cap)
    vmem_limit = _vmem_limit_bytes(tm, H, act_itemsize, w_itemsize, vmem_cap)

    x2d = hidden_states.reshape(M, H)
    r2d = input_tensor.reshape(M, H)

    try:
        out2d = _pallas_forward(x2d, r2d, weight_t, params, tm=tm,
                                vmem_limit=vmem_limit, single_buffer=True)
    except Exception:
        # Fallback if this JAX build rejects pl.Buffered(1) single-buffering.
        out2d = _pallas_forward(x2d, r2d, weight_t, params, tm=tm,
                                vmem_limit=vmem_limit, single_buffer=False)
    return out2d.reshape(B, S, H)


# ----------------------------------------------------------------------------- reference
def reference(hidden_states, input_tensor, weight, bias, gamma, beta):
    h = jnp.einsum("bsh,oh->bso", hidden_states, weight) + bias
    y = h + input_tensor
    mean = jnp.mean(y, axis=-1, keepdims=True)
    var = jnp.mean((y - mean) ** 2, axis=-1, keepdims=True)
    return (y - mean) / jnp.sqrt(var + LN_EPS) * gamma + beta


if __name__ == "__main__":
    def run_case(B, S, H, key, *, weight_dtype, atol):
        k1, k2, k3, k4, k5, k6 = jax.random.split(key, 6)
        hidden_states = jax.random.normal(k1, (B, S, H), dtype=jnp.float32)
        input_tensor = jax.random.normal(k2, (B, S, H), dtype=jnp.float32)
        weight = jax.random.normal(k3, (H, H), dtype=jnp.float32) * 0.02  # (out, in)
        bias = jax.random.normal(k4, (H,), dtype=jnp.float32) * 0.02
        gamma = 1.0 + 0.1 * jax.random.normal(k5, (H,), dtype=jnp.float32)
        beta = 0.05 * jax.random.normal(k6, (H,), dtype=jnp.float32)

        # One-time prepack (transpose + dtype cast hoisted out of the hot path).
        w_t, params = prepack_params(weight, bias, gamma, beta, weight_dtype=weight_dtype)

        out = bert_att_output(hidden_states, input_tensor, w_t, params)
        out = jax.block_until_ready(out)

        ref = reference(hidden_states, input_tensor, weight, bias, gamma, beta)
        assert out.shape == (B, S, H)
        assert bool(jnp.allclose(out, ref, atol=atol, rtol=atol)), (
            f"mismatch vs reference (H={H}, weight_dtype={weight_dtype})")

    root = jax.random.PRNGKey(0)
    k0, k1, k2 = jax.random.split(root, 3)
    # f32 debug path, tight tolerance (batch=2, seq=8, hidden=32).
    run_case(2, 8, 32, k0, weight_dtype=jnp.float32, atol=1e-5)
    # bf16 MXU path (production setting), loosened tolerance.
    run_case(2, 8, 32, k1, weight_dtype=jnp.bfloat16, atol=2e-2)
    # Ragged row count (M not a multiple of the row tile) exercises the cdiv grid.
    run_case(2, 5, 32, k2, weight_dtype=jnp.bfloat16, atol=2e-2)

    print("KERNEL_OK")
</pallas_src>

<mosaic_0001>
module attributes {stable_mosaic.version = 11 : i64} {
  func.func @bert_att_output_kernel(%arg0: i32, %arg1: memref<8x32xf32, #tpu.memory_space<vmem>>, %arg2: memref<8x32xf32, #tpu.memory_space<vmem>>, %arg3: memref<32x32xf32, #tpu.memory_space<vmem>>, %arg4: memref<3x32xf32, #tpu.memory_space<vmem>>, %arg5: memref<8x32xf32, #tpu.memory_space<vmem>>) attributes {dimension_semantics = [#tpu.dimension_semantics<parallel>], iteration_bounds = array<i64: 2>, scalar_prefetch = 0 : i64, scratch_operands = 0 : i64, tpu.core_type = #tpu.core_type<tc>, window_params = [{transform_indices = @transform_0, window_bounds = array<i64: 8, 32>}, {transform_indices = @transform_1, window_bounds = array<i64: 8, 32>}, {pipeline_mode = #tpu.pipeline_mode<synchronous>, transform_indices = @transform_2, window_bounds = array<i64: 32, 32>}, {pipeline_mode = #tpu.pipeline_mode<synchronous>, transform_indices = @transform_3, window_bounds = array<i64: 3, 32>}, {transform_indices = @transform_4, window_bounds = array<i64: 8, 32>}]} {
    %c0 = arith.constant 0 : index
    %c0_0 = arith.constant 0 : index
    %0 = vector.load %arg3[%c0, %c0_0] : memref<32x32xf32, #tpu.memory_space<vmem>>, vector<32x32xf32>
    %c0_1 = arith.constant 0 : index
    %c0_2 = arith.constant 0 : index
    %1 = vector.load %arg1[%c0_1, %c0_2] : memref<8x32xf32, #tpu.memory_space<vmem>>, vector<8x32xf32>
    %cst = arith.constant dense<0.000000e+00> : vector<8x32xf32>
    %2 = tpu.matmul %1, %0, %cst {dimension_numbers = #tpu.dot_dimension_numbers<[1], [0], [0], [1], [0, 0, 1, 1], [], []>} : vector<8x32xf32>, vector<32x32xf32>, vector<8x32xf32> -> vector<8x32xf32>
    %c0_3 = arith.constant 0 : index
    %c0_4 = arith.constant 0 : index
    %3 = vector.load %arg4[%c0_3, %c0_4] : memref<3x32xf32, #tpu.memory_space<vmem>>, vector<3x32xf32>
    %4 = vector.extract_strided_slice %3 {offsets = [0, 0], sizes = [1, 32], strides = [1, 1]} : vector<3x32xf32> to vector<1x32xf32>
    %5 = vector.extract_strided_slice %3 {offsets = [1, 0], sizes = [1, 32], strides = [1, 1]} : vector<3x32xf32> to vector<1x32xf32>
    %6 = vector.extract_strided_slice %3 {offsets = [2, 0], sizes = [1, 32], strides = [1, 1]} : vector<3x32xf32> to vector<1x32xf32>
    %7 = vector.broadcast %4 : vector<1x32xf32> to vector<8x32xf32>
    %8 = arith.addf %2, %7 : vector<8x32xf32>
    %c0_5 = arith.constant 0 : index
    %c0_6 = arith.constant 0 : index
    %9 = vector.load %arg2[%c0_5, %c0_6] : memref<8x32xf32, #tpu.memory_space<vmem>>, vector<8x32xf32>
    %10 = arith.addf %8, %9 : vector<8x32xf32>
    %cst_7 = arith.constant dense<0.000000e+00> : vector<8xf32>
    %11 = vector.multi_reduction <add>, %10, %cst_7 [1] : vector<8x32xf32> to vector<8xf32>
    %12 = vector.shape_cast %11 : vector<8xf32> to vector<8x1xf32>
    %cst_8 = arith.constant 3.200000e+01 : f32
    %13 = vector.broadcast %cst_8 : f32 to vector<8x1xf32>
    %14 = arith.divf %12, %13 : vector<8x1xf32>
    %15 = vector.broadcast %14 : vector<8x1xf32> to vector<8x32xf32>
    %16 = arith.subf %10, %15 : vector<8x32xf32>
    %17 = arith.mulf %16, %16 : vector<8x32xf32>
    %cst_9 = arith.constant dense<0.000000e+00> : vector<8xf32>
    %18 = vector.multi_reduction <add>, %17, %cst_9 [1] : vector<8x32xf32> to vector<8xf32>
    %19 = vector.shape_cast %18 : vector<8xf32> to vector<8x1xf32>
    %cst_10 = arith.constant 3.200000e+01 : f32
    %20 = vector.broadcast %cst_10 : f32 to vector<8x1xf32>
    %21 = arith.divf %19, %20 : vector<8x1xf32>
    %cst_11 = arith.constant 9.99999996E-13 : f32
    %22 = vector.broadcast %cst_11 : f32 to vector<8x1xf32>
    %23 = arith.addf %21, %22 : vector<8x1xf32>
    %24 = math.rsqrt %23 : vector<8x1xf32>
    %25 = vector.broadcast %24 : vector<8x1xf32> to vector<8x32xf32>
    %26 = arith.mulf %16, %25 : vector<8x32xf32>
    %27 = vector.broadcast %5 : vector<1x32xf32> to vector<8x32xf32>
    %28 = arith.mulf %26, %27 : vector<8x32xf32>
    %29 = vector.broadcast %6 : vector<1x32xf32> to vector<8x32xf32>
    %30 = arith.addf %28, %29 : vector<8x32xf32>
    %c0_12 = arith.constant 0 : index
    %c0_13 = arith.constant 0 : index
    %31 = vector.load %arg5[%c0_12, %c0_13] : memref<8x32xf32, #tpu.memory_space<vmem>>, vector<8x32xf32>
    tpu.vector_store %arg5[%c0_12, %c0_13], %30 {strides = array<i32>} : memref<8x32xf32, #tpu.memory_space<vmem>>, vector<8x32xf32>,
    return
  }
  func.func @transform_0(%arg0: i32) -> (i32, i32) {
    %c0_i32 = arith.constant 0 : i32
    %c0_i32_0 = arith.constant 0 : i32
    return %arg0, %c0_i32 : i32, i32
  }
  func.func @transform_1(%arg0: i32) -> (i32, i32) {
    %c0_i32 = arith.constant 0 : i32
    %c0_i32_0 = arith.constant 0 : i32
    return %arg0, %c0_i32 : i32, i32
  }
  func.func @transform_2(%arg0: i32) -> (i32, i32) {
    %c0_i32 = arith.constant 0 : i32
    %c0_i32_0 = arith.constant 0 : i32
    %c0_i32_1 = arith.constant 0 : i32
    return %c0_i32, %c0_i32_0 : i32, i32
  }
  func.func @transform_3(%arg0: i32) -> (i32, i32) {
    %c0_i32 = arith.constant 0 : i32
    %c0_i32_0 = arith.constant 0 : i32
    %c0_i32_1 = arith.constant 0 : i32
    return %c0_i32, %c0_i32_0 : i32, i32
  }
  func.func @transform_4(%arg0: i32) -> (i32, i32) {
    %c0_i32 = arith.constant 0 : i32
    %c0_i32_0 = arith.constant 0 : i32
    return %arg0, %c0_i32 : i32, i32
  }
}

module attributes {stable_mosaic.version = 11 : i64} {
  func.func @bert_att_output_kernel(%arg0: i32, %arg1: memref<8x32xf32, #tpu.memory_space<vmem>>, %arg2: memref<8x32xf32, #tpu.memory_space<vmem>>, %arg3: memref<32x32xf32, #tpu.memory_space<vmem>>, %arg4: memref<3x32xf32, #tpu.memory_space<vmem>>, %arg5: memref<8x32xf32, #tpu.memory_space<vmem>>) attributes {dimension_semantics = [#tpu.dimension_semantics<parallel>], iteration_bounds = array<i64: 2>, scalar_prefetch = 0 : i64, scratch_operands = 0 : i64, tpu.core_type = #tpu.core_type<tc>, window_params = [{transform_indices = @transform_0, window_bounds = array<i64: 8, 32>}, {transform_indices = @transform_1, window_bounds = array<i64: 8, 32>}, {pipeline_mode = #tpu.pipeline_mode<synchronous>, transform_indices = @transform_2, window_bounds = array<i64: 32, 32>}, {pipeline_mode = #tpu.pipeline_mode<synchronous>, transform_indices = @transform_3, window_bounds = array<i64: 3, 32>}, {transform_indices = @transform_4, window_bounds = array<i64: 8, 32>}]} {
    %c0 = arith.constant 0 : index
    %c0_0 = arith.constant 0 : index
    %0 = vector.load %arg3[%c0, %c0_0] : memref<32x32xf32, #tpu.memory_space<vmem>>, vector<32x32xf32>
    %c0_1 = arith.constant 0 : index
    %c0_2 = arith.constant 0 : index
    %1 = vector.load %arg1[%c0_1, %c0_2] : memref<8x32xf32, #tpu.memory_space<vmem>>, vector<8x32xf32>
    %cst = arith.constant dense<0.000000e+00> : vector<8x32xf32>
    %2 = tpu.matmul %1, %0, %cst {dimension_numbers = #tpu.dot_dimension_numbers<[1], [0], [0], [1], [0, 0, 1, 1], [], []>} : vector<8x32xf32>, vector<32x32xf32>, vector<8x32xf32> -> vector<8x32xf32>
    %c0_3 = arith.constant 0 : index
    %c0_4 = arith.constant 0 : index
    %3 = vector.load %arg4[%c0_3, %c0_4] : memref<3x32xf32, #tpu.memory_space<vmem>>, vector<3x32xf32>
    %4 = vector.extract_strided_slice %3 {offsets = [0, 0], sizes = [1, 32], strides = [1, 1]} : vector<3x32xf32> to vector<1x32xf32>
    %5 = vector.extract_strided_slice %3 {offsets = [1, 0], sizes = [1, 32], strides = [1, 1]} : vector<3x32xf32> to vector<1x32xf32>
    %6 = vector.extract_strided_slice %3 {offsets = [2, 0], sizes = [1, 32], strides = [1, 1]} : vector<3x32xf32> to vector<1x32xf32>
    %7 = vector.broadcast %4 : vector<1x32xf32> to vector<8x32xf32>
    %8 = arith.addf %2, %7 : vector<8x32xf32>
    %c0_5 = arith.constant 0 : index
    %c0_6 = arith.constant 0 : index
    %9 = vector.load %arg2[%c0_5, %c0_6] : memref<8x32xf32, #tpu.memory_space<vmem>>, vector<8x32xf32>
    %10 = arith.addf %8, %9 : vector<8x32xf32>
    %cst_7 = arith.constant dense<0.000000e+00> : vector<8xf32>
    %11 = vector.multi_reduction <add>, %10, %cst_7 [1] : vector<8x32xf32> to vector<8xf32>
    %12 = vector.shape_cast %11 : vector<8xf32> to vector<8x1xf32>
    %cst_8 = arith.constant 3.200000e+01 : f32
    %13 = vector.broadcast %cst_8 : f32 to vector<8x1xf32>
    %14 = arith.divf %12, %13 : vector<8x1xf32>
    %15 = vector.broadcast %14 : vector<8x1xf32> to vector<8x32xf32>
    %16 = arith.subf %10, %15 : vector<8x32xf32>
    %17 = arith.mulf %16, %16 : vector<8x32xf32>
    %cst_9 = arith.constant dense<0.000000e+00> : vector<8xf32>
    %18 = vector.multi_reduction <add>, %17, %cst_9 [1] : vector<8x32xf32> to vector<8xf32>
    %19 = vector.shape_cast %18 : vector<8xf32> to vector<8x1xf32>
    %cst_10 = arith.constant 3.200000e+01 : f32
    %20 = vector.broadcast %cst_10 : f32 to vector<8x1xf32>
    %21 = arith.divf %19, %20 : vector<8x1xf32>
    %cst_11 = arith.constant 9.99999996E-13 : f32
    %22 = vector.broadcast %cst_11 : f32 to vector<8x1xf32>
    %23 = arith.addf %21, %22 : vector<8x1xf32>
    %24 = math.rsqrt %23 : vector<8x1xf32>
    %25 = vector.broadcast %24 : vector<8x1xf32> to vector<8x32xf32>
    %26 = arith.mulf %16, %25 : vector<8x32xf32>
    %27 = vector.broadcast %5 : vector<1x32xf32> to vector<8x32xf32>
    %28 = arith.mulf %26, %27 : vector<8x32xf32>
    %29 = vector.broadcast %6 : vector<1x32xf32> to vector<8x32xf32>
    %30 = arith.addf %28, %29 : vector<8x32xf32>
    %c0_12 = arith.constant 0 : index
    %c0_13 = arith.constant 0 : index
    %31 = vector.load %arg5[%c0_12, %c0_13] : memref<8x32xf32, #tpu.memory_space<vmem>>, vector<8x32xf32>
    tpu.vector_store %arg5[%c0_12, %c0_13], %30 {strides = array<i32>} : memref<8x32xf32, #tpu.memory_space<vmem>>, vector<8x32xf32>,
    return
  }
  func.func @transform_0(%arg0: i32) -> (i32, i32) {
    %c0_i32 = arith.constant 0 : i32
    %c0_i32_0 = arith.constant 0 : i32
    return %arg0, %c0_i32 : i32, i32
  }
  func.func @transform_1(%arg0: i32) -> (i32, i32) {
    %c0_i32 = arith.constant 0 : i32
    %c0_i32_0 = arith.constant 0 : i32
    return %arg0, %c0_i32 : i32, i32
  }
  func.func @transform_2(%arg0: i32) -> (i32, i32) {
    %c0_i32 = arith.constant 0 : i32
    %c0_i32_0 = arith.constant 0 : i32
    %c0_i32_1 = arith.constant 0 : i32
    return %c0_i32, %c0_i32_0 : i32, i32
  }
  func.func @transform_3(%arg0: i32) -> (i32, i32) {
    %c0_i32 = arith.constant 0 : i32
    %c0_i32_0 = arith.constant 0 : i32
    %c0_i32_1 = arith.constant 0 : i32
    return %c0_i32, %c0_i32_0 : i32, i32
  }
  func.func @transform_4(%arg0: i32) -> (i32, i32) {
    %c0_i32 = arith.constant 0 : i32
    %c0_i32_0 = arith.constant 0 : i32
    return %arg0, %c0_i32 : i32, i32
  }
}

</mosaic_0001>

<llo_original>
// kernel: tpu_custom_call.1
$region0: #{tpu_custom_call.1}
  #allocation0 [shape = 'u32[]', space=smem, size = 0x4, offset = 0x4, fixed_abs, tag = 'smem constant byte address 0x4 - core index']
  #allocation1 [shape = 'u32[72,128]{1,0:T(1,128)}', space=vmem, size = 0x9000, scoped, tag = 'internal scratch']
  %s0 = inlined_call_operand.hbm [shape: f32[16,32], index: 0, kind: input, shape index: {}]
  %s1 = inlined_call_operand.hbm [shape: f32[16,32], index: 1, kind: input, shape index: {}]
  %s2 = inlined_call_operand.hbm [shape: f32[32,32], index: 2, kind: input, shape index: {}]
  %s3 = inlined_call_operand.hbm [shape: f32[3,32], index: 3, kind: input, shape index: {}]
  %s4 = inlined_call_operand.hbm [shape: f32[16,32], index: 4, kind: output, shape index: {}]
  %s5 = sld [smem:[#allocation0]]
  $region65: #{tpu_custom_call.1} parent=0
    _
  %s7 = ssub.s32 1, %s5
  %s8 = scalar_select 0, %s7, %s5
  $region1: #{tpu_custom_call.1} parent=0
    #allocation2 [shape = 'u8[8192]{0}', space=vmem, size = 0x2000, scoped, tag = 'input window, operand 0']
    #allocation3 [shape = 's32[2]{0}', space=sflag, size = 0x8, scoped, tag = 'scoped memory for tpu_custom_call.1']
    #allocation4 [shape = 's32[2]{0}', space=sflag, size = 0x8, scoped, tag = 'scoped memory for tpu_custom_call.1']
    #allocation5 [shape = 'u8[8192]{0}', space=vmem, size = 0x2000, scoped, tag = 'input window, operand 1']
    #allocation6 [shape = 's32[2]{0}', space=sflag, size = 0x8, scoped, tag = 'scoped memory for tpu_custom_call.1']
    #allocation7 [shape = 'u8[16384]{0}', space=vmem, size = 0x4000, scoped, tag = 'input window, operand 2, single buffered']
    #allocation8 [shape = 'u8[2048]{0}', space=vmem, size = 0x800, scoped, tag = 'input window, operand 3, single buffered']
    #allocation9 [shape = 's32[1]{0}', space=sflag, size = 0x4, scoped, tag = 'scoped memory for tpu_custom_call.1']
    #allocation10 [shape = 'u8[8192]{0}', space=vmem, size = 0x2000, scoped, tag = 'output window, operand 0']
    %9 = vsyncpa [#allocation3], 0
    %s10 = scalar_lea.sflag [#allocation3], 1
    %11 = vsyncpa %s10, 0
    %12 = vsyncpa [#allocation6], 0
    %s13 = scalar_lea.sflag [#allocation6], 1
    %14 = vsyncpa %s13, 0
    %15 = vsyncpa [#allocation9], 0
    %16 = vsyncpa [#allocation4], 0
    %s17 = scalar_lea.sflag [#allocation4], 1
    %18 = vsyncpa %s17, 0
    loop: start=0, step=1, limit=4
    $region2: #{tpu_custom_call.1} parent=1 // loop_pre_header
      _
    $region3: #{tpu_custom_call.1} parent=1 // loop_header
      %s20 = sphi 0, %s24
      %p21 = scmp.ge.s32.totalorder %s20, 4
      %s30 = sphi 0, %s32
      %s33 = sphi 0, %s30
      %s34 = sphi 0, %s33
      %s50 = sphi 0, %s34
      %s56 = sphi 0, %s58
      %s59 = sphi 0, %s56
      %s60 = sphi 0, %s59
      %s76 = sphi 0, %s60
      %s80 = sphi 0, %s80
      %s82 = sphi 0, %s80
      %s83 = sphi 0, %s82
      %s97 = sphi 0, %s83
      %s101 = sphi 0, %s101
      %s103 = sphi 0, %s101
      %s104 = sphi 0, %s103
      %s118 = sphi 0, %s104
      %s124 = sphi 0, %s126
      %s127 = sphi 0, %s124
      %s128 = sphi 0, %s127
      %s144 = sphi 0, %s128
    $region4: #{tpu_custom_call.1} parent=1 // loop_header_branch
      %23 = sbr.rel (%p21) target = $region8
    $region5: #{tpu_custom_call.1} parent=1 // loop_body
      %s25 = ssub.s32 %s20, 1
      %s26 = ssub.s32 %s20, 2
      %s27 = sadd.s32 %s20, 1
      %s28 = ssub.s32 %s20, %s27
      %p29 = scmp.eq.s32.totalorder %s28, 0
      %s31 = sadd.s32 %s30, 1
      %s32 = scalar_select %p29, %s30, %s31
      %p35 = pneg %p29
      %p36 = scmp.eq.s32.totalorder %s20, 1
      %p37 = por %p35, %p36
      %p38 = scmp.ne.s32.totalorder %s30, %s33
      %p39 = scmp.eq.s32.totalorder %s20, 0
      %p40 = por %p38, %p39
      %p41 = scmp.ne.s32.totalorder %s30, %s33
      %p42 = scmp.eq.s32.totalorder %s25, 1
      %p43 = por %p41, %p42
      %p44 = scmp.ne.s32.totalorder %s33, %s34
      %p45 = scmp.eq.s32.totalorder %s25, 0
      %p46 = por %p44, %p45
      %p47 = scmp.ne.s32.totalorder %s33, %s34
      %p48 = scmp.eq.s32.totalorder %s26, 1
      %p49 = por %p47, %p48
      %p51 = scmp.ne.s32.totalorder %s34, %s50
      %p52 = scmp.eq.s32.totalorder %s26, 0
      %p53 = por %p51, %p52
      %s54 = ssub.s32 %s20, %s27
      %p55 = scmp.eq.s32.totalorder %s54, 0
      %s57 = sadd.s32 %s56, 1
      %s58 = scalar_select %p55, %s56, %s57
      %p61 = pneg %p55
      %p62 = scmp.eq.s32.totalorder %s20, 1
      %p63 = por %p61, %p62
      %p64 = scmp.ne.s32.totalorder %s56, %s59
      %p65 = scmp.eq.s32.totalorder %s20, 0
      %p66 = por %p64, %p65
      %p67 = scmp.ne.s32.totalorder %s56, %s59
      %p68 = scmp.eq.s32.totalorder %s25, 1
      %p69 = por %p67, %p68
      %p70 = scmp.ne.s32.totalorder %s59, %s60
      %p71 = scmp.eq.s32.totalorder %s25, 0
      %p72 = por %p70, %p71
      %p73 = scmp.ne.s32.totalorder %s59, %s60
      %p74 = scmp.eq.s32.totalorder %s26, 1
      %p75 = por %p73, %p74
      %p77 = scmp.ne.s32.totalorder %s60, %s76
      %p78 = scmp.eq.s32.totalorder %s26, 0
      %p79 = por %p77, %p78
      %s81 = sadd.s32 %s80, 1
      %p84 = scmp.eq.s32.totalorder %s20, 1
      %p85 = scmp.ne.s32.totalorder %s80, %s82
      %p86 = scmp.eq.s32.totalorder %s20, 0
      %p87 = por %p85, %p86
      %p88 = scmp.ne.s32.totalorder %s80, %s82
      %p89 = scmp.eq.s32.totalorder %s25, 1
      %p90 = por %p88, %p89
      %p91 = scmp.ne.s32.totalorder %s82, %s83
      %p92 = scmp.eq.s32.totalorder %s25, 0
      %p93 = por %p91, %p92
      %p94 = scmp.ne.s32.totalorder %s82, %s83
      %p95 = scmp.eq.s32.totalorder %s26, 1
      %p96 = por %p94, %p95
      %p98 = scmp.ne.s32.totalorder %s83, %s97
      %p99 = scmp.eq.s32.totalorder %s26, 0
      %p100 = por %p98, %p99
      %s102 = sadd.s32 %s101, 1
      %p105 = scmp.eq.s32.totalorder %s20, 1
      %p106 = scmp.ne.s32.totalorder %s101, %s103
      %p107 = scmp.eq.s32.totalorder %s20, 0
      %p108 = por %p106, %p107
      %p109 = scmp.ne.s32.totalorder %s101, %s103
      %p110 = scmp.eq.s32.totalorder %s25, 1
      %p111 = por %p109, %p110
      %p112 = scmp.ne.s32.totalorder %s103, %s104
      %p113 = scmp.eq.s32.totalorder %s25, 0
      %p114 = por %p112, %p113
      %p115 = scmp.ne.s32.totalorder %s103, %s104
      %p116 = scmp.eq.s32.totalorder %s26, 1
      %p117 = por %p115, %p116
      %p119 = scmp.ne.s32.totalorder %s104, %s118
      %p120 = scmp.eq.s32.totalorder %s26, 0
      %p121 = por %p119, %p120
      %s122 = ssub.s32 %s20, %s27
      %p123 = scmp.eq.s32.totalorder %s122, 0
      %s125 = sadd.s32 %s124, 1
      %s126 = scalar_select %p123, %s124, %s125
      %p129 = pneg %p123
      %p130 = scmp.eq.s32.totalorder %s20, 1
      %p131 = por %p129, %p130
      %p132 = scmp.ne.s32.totalorder %s124, %s127
      %p133 = scmp.eq.s32.totalorder %s20, 0
      %p134 = por %p132, %p133
      %p135 = scmp.ne.s32.totalorder %s124, %s127
      %p136 = scmp.eq.s32.totalorder %s25, 1
      %p137 = por %p135, %p136
      %p138 = scmp.ne.s32.totalorder %s127, %s128
      %p139 = scmp.eq.s32.totalorder %s25, 0
      %p140 = por %p138, %p139
      %p141 = scmp.ne.s32.totalorder %s127, %s128
      %p142 = scmp.eq.s32.totalorder %s26, 1
      %p143 = por %p141, %p142
      %p145 = scmp.ne.s32.totalorder %s128, %s144
      %p146 = scmp.eq.s32.totalorder %s26, 0
      %p147 = por %p145, %p146
      %p148 = scmp.le.s32.totalorder 1, %s20
      %p149 = scmp.lt.s32.totalorder %s20, 3
      %p150 = pnand %p148, %p149
      %p151 = pneg %p150
      // Predicated region
      $region9: #{tpu_custom_call.1} parent=5 // pred_check
        _
      $region10: #{tpu_custom_call.1} parent=5 // pred_check_branch
        %153 = sbr.rel (%p150) target = $region12
      $region11: #{tpu_custom_call.1} parent=5 // pred_region
        %s154 = ssub.s32 %s20, 1
        // Predicated region
        $region13: #{tpu_custom_call.1} parent=11 // pred_check
          %p155 = pneg %p93
        $region14: #{tpu_custom_call.1} parent=11 // pred_check_branch
          %157 = sbr.rel (%p155) target = $region16
        $region15: #{tpu_custom_call.1} parent=11 // pred_region
          %159 = vsyncadd [#allocation6], 0
          %s160 = sshll.u32 %s2, 4
          %s161 = int_to_ptr.hbm [resolvable:$true] %s160
          %s162 = sshll.u32 [#allocation7], 4
          %s163 = int_to_ptr.vmem [resolvable:$true] %s162
          %168 = dma.hbm_to_vmem [thread:$0]  %s161, 512, %s163, [#allocation6], 128, 128, 8
        $region16: #{tpu_custom_call.1} parent=11 // pred_fallthru
          _
        // Predicated region
        $region17: #{tpu_custom_call.1} parent=11 // pred_check
          %p169 = pneg %p114
        $region18: #{tpu_custom_call.1} parent=11 // pred_check_branch
          %171 = sbr.rel (%p169) target = $region20
        $region19: #{tpu_custom_call.1} parent=11 // pred_region
          %173 = vsyncadd [#allocation9], 0
          %s175 = sshll.u32 %s3, 4
          %s176 = int_to_ptr.hbm [resolvable:$true] %s175
          %s177 = sshll.u32 [#allocation8], 4
          %s178 = int_to_ptr.vmem [resolvable:$true] %s177
          %180 = dma.hbm_to_vmem [thread:$0]  %s176, 64, %s178, [#allocation9]
        $region20: #{tpu_custom_call.1} parent=11 // pred_fallthru
          _
      $region12: #{tpu_custom_call.1} parent=5 // pred_fallthru
        _
      %p181 = scmp.lt.s32.totalorder %s20, 2
      // Predicated region
      $region21: #{tpu_custom_call.1} parent=5 // pred_check
        %p182 = pneg %p181
      $region22: #{tpu_custom_call.1} parent=5 // pred_check_branch
        %184 = sbr.rel (%p182) target = $region24
      $region23: #{tpu_custom_call.1} parent=5 // pred_region
        // Predicated region
        $region25: #{tpu_custom_call.1} parent=23 // pred_check
          %p185 = pneg %p40
        $region26: #{tpu_custom_call.1} parent=23 // pred_check_branch
          %187 = sbr.rel (%p185) target = $region28
        $region27: #{tpu_custom_call.1} parent=23 // pred_region
          %s188 = sand.u32 %s30, 1
          %s189 = scalar_lea.sflag [#allocation3], %s188
          %s190 = sand.u32 %s30, 1
          %s191 = smul.addr %s190, 8
          %s192 = scalar_lea.vmem [#allocation2], %s191
          %194 = vsyncadd %s189, 0
          %s195 = smul.addr %s20, 8
          %s196 = scalar_lea.hbm %s0, %s195
          %s198 = sshll.u32 %s196, 4
          %s199 = int_to_ptr.hbm [resolvable:$true] %s198
          %s200 = sshll.u32 %s192, 4
          %s201 = int_to_ptr.vmem [resolvable:$true] %s200
          %203 = dma.hbm_to_vmem [thread:$0]  %s199, 128, %s201, %s189
        $region28: #{tpu_custom_call.1} parent=23 // pred_fallthru
          _
        // Predicated region
        $region29: #{tpu_custom_call.1} parent=23 // pred_check
          %p204 = pneg %p66
        $region30: #{tpu_custom_call.1} parent=23 // pred_check_branch
          %206 = sbr.rel (%p204) target = $region32
        $region31: #{tpu_custom_call.1} parent=23 // pred_region
          %s207 = sand.u32 %s20, 1
          %s208 = scalar_lea.sflag [#allocation6], %s207
          %s209 = sand.u32 %s56, 1
          %s210 = smul.addr %s209, 8
          %s211 = scalar_lea.vmem [#allocation5], %s210
          %213 = vsyncadd %s208, 0
          %s214 = smul.addr %s20, 8
          %s215 = scalar_lea.hbm %s1, %s214
          %s217 = sshll.u32 %s215, 4
          %s218 = int_to_ptr.hbm [resolvable:$true] %s217
          %s219 = sshll.u32 %s211, 4
          %s220 = int_to_ptr.vmem [resolvable:$true] %s219
          %222 = dma.hbm_to_vmem [thread:$0]  %s218, 128, %s220, %s208
        $region32: #{tpu_custom_call.1} parent=23 // pred_fallthru
          _
      $region24: #{tpu_custom_call.1} parent=5 // pred_fallthru
        _
      %p223 = scmp.le.s32.totalorder 1, %s20
      %p224 = scmp.lt.s32.totalorder %s20, 3
      %p225 = pnand %p223, %p224
      %p226 = pneg %p225
      // Predicated region
      $region33: #{tpu_custom_call.1} parent=5 // pred_check
        _
      $region34: #{tpu_custom_call.1} parent=5 // pred_check_branch
        %228 = sbr.rel (%p225) target = $region36
      $region35: #{tpu_custom_call.1} parent=5 // pred_region
        %s229 = ssub.s32 %s20, 1
        %s230 = sand.u32 %s33, 1
        %s231 = scalar_lea.sflag [#allocation3], %s230
        %s232 = sand.u32 %s33, 1
        %s233 = smul.addr %s232, 8
        %s234 = scalar_lea.vmem [#allocation2], %s233
        // Predicated region
        $region37: #{tpu_custom_call.1} parent=35 // pred_check
          %p235 = pneg %p46
        $region38: #{tpu_custom_call.1} parent=35 // pred_check_branch
          %237 = sbr.rel (%p235) target = $region40
        $region39: #{tpu_custom_call.1} parent=35 // pred_region
          %239 = dma.done %s231, 128
        $region40: #{tpu_custom_call.1} parent=35 // pred_fallthru
          _
        %s240 = sand.u32 %s25, 1
        %s241 = scalar_lea.sflag [#allocation6], %s240
        %s242 = sand.u32 %s59, 1
        %s243 = smul.addr %s242, 8
        %s244 = scalar_lea.vmem [#allocation5], %s243
        // Predicated region
        $region41: #{tpu_custom_call.1} parent=35 // pred_check
          %p245 = pneg %p72
        $region42: #{tpu_custom_call.1} parent=35 // pred_check_branch
          %247 = sbr.rel (%p245) target = $region44
        $region43: #{tpu_custom_call.1} parent=35 // pred_region
          %249 = dma.done %s241, 128
        $region44: #{tpu_custom_call.1} parent=35 // pred_fallthru
          _
        // Predicated region
        $region45: #{tpu_custom_call.1} parent=35 // pred_check
          %p250 = pneg %p93
        $region46: #{tpu_custom_call.1} parent=35 // pred_check_branch
          %252 = sbr.rel (%p250) target = $region48
        $region47: #{tpu_custom_call.1} parent=35 // pred_region
          %254 = dma.done [#allocation6], 512
        $region48: #{tpu_custom_call.1} parent=35 // pred_fallthru
          _
        // Predicated region
        $region49: #{tpu_custom_call.1} parent=35 // pred_check
          %p255 = pneg %p114
        $region50: #{tpu_custom_call.1} parent=35 // pred_check_branch
          %257 = sbr.rel (%p255) target = $region52
        $region51: #{tpu_custom_call.1} parent=35 // pred_region
          %259 = dma.done [#allocation9], 64
        $region52: #{tpu_custom_call.1} parent=35 // pred_fallthru
          _
        %s260 = sand.u32 %s33, 1
        %s261 = scalar_lea.sflag [#allocation3], %s260
        %s262 = sand.u32 %s33, 1
        %s263 = smul.addr %s262, 8
        %s264 = scalar_lea.vmem [#allocation2], %s263
        %p265 = pneg %p46
        %p266 = pneg %p43
        %s267 = sand.u32 %s25, 1
        %s268 = scalar_lea.sflag [#allocation6], %s267
        %s269 = sand.u32 %s59, 1
        %s270 = smul.addr %s269, 8
        %s271 = scalar_lea.vmem [#allocation5], %s270
        %p272 = pneg %p72
        %p273 = pneg %p69
        %p274 = pneg %p93
        %p275 = pneg %p90
        %p276 = pneg %p114
        %p277 = pneg %p111
        %p278 = pneg %p140
        %p279 = pneg %p137
        %s280 = sand.u32 %s127, 1
        %s281 = scalar_lea.sflag [#allocation4], %s280
        %s282 = sand.u32 %s127, 1
        %s283 = smul.addr %s282, 8
        %s284 = scalar_lea.vmem [#allocation10], %s283
        %v285 = vld [vmem:[#allocation7] sm:$0xff]
        %v286 = vld [vmem:[#allocation7 + $0x8] sm:$0xff]
        %v287 = vld [vmem:[#allocation7 + $0x10] sm:$0xff]
        %v288 = vld [vmem:[#allocation7 + $0x18] sm:$0xff]
        %v289 = vld [vmem:[%s234] sm:$0xff]
        %v290 = vld [vmem:[#allocation8] sm:$0x7]
        %v291 = vperm.slane %v290, 0
        %vm292 = vcmask 261120
        %v294 = vsel %vm292, %v289, 0
        %296 = vmatpush.msra.mxu0 0.0
        %297 = vmatpush.msra.mxu0 0.0
        %298 = vmatpush.msra.mxu0 0.0
        %299 = vmatpush.msra.mxu0 0.0
        %300 = vmatpush.msra.mxu0 0.0
        %301 = vmatpush.msra.mxu0 0.0
        %302 = vmatpush.msra.mxu0 0.0
        %303 = vmatpush.msra.mxu0 0.0
        %304 = vmatpush.msra.mxu0 0.0
        %305 = vmatpush.msra.mxu0 0.0
        %306 = vmatpush.msra.mxu0 0.0
        %307 = vmatpush.msra.mxu0 0.0
        %308 = vmatpush.msra.mxu0 %v288
        %309 = vmatpush.msra.mxu0 %v287
        %310 = vmatpush.msra.mxu0 %v286
        %311 = vmatpush.msra.mxu0 %v285
        %312 = vmatmul.f32.gmra.mxu0 %v294
        %v313 = vpop.f32.mrf.mxu0
        %v314 = vadd.f32 %v291, %v313
        %315 = vdwg.mxu0
        %v316 = vld [vmem:[%s244] sm:$0xff]
        %v317 = vadd.f32 %v314, %v316
        %v318 = vsel %vm292, %v317, 0.0
        %319 = vadd.xlane.f32.xlu0 %v318
        %v320 = vpop.xlane.xlu0 %319
        %v321 = vrcp.pop 32.0
        %v322 = vmul.f32 32.0, %v321
        %v323 = vsub.f32 1.0, %v322
        %v324 = vmul.f32 %v321, %v323
        %v325 = vadd.f32 %v321, %v324
        %vm326 = vweird.f32 %v321
        %v327 = vsel %vm326, %v321, %v325
        %v328 = vmul.f32 %v320, %v327
        %v329 = vsub.f32 %v317, %v328
        %v330 = vmul.f32 %v329, %v329
        %v331 = vsel %vm292, %v330, 0.0
        %332 = vadd.xlane.f32.xlu0 %v331
        %v333 = vpop.xlane.xlu0 %332
        %v334 = vmul.f32 %v333, %v327
        %v335 = vadd.f32 %v334, 1e-12
        %v336 = vrsqrt.pop %v335
        %v337 = vmul.f32 %v336, %v335
        %v338 = vmul.f32 %v337, %v336
        %v339 = vmul.f32 0.5, %v338
        %v340 = vsub.f32 1.5, %v339
        %v341 = vmul.f32 %v336, %v340
        %vm342 = vweird.f32 %v335
        %vm343 = vweird.f32 %v336
        %vm344 = vmor %vm342, %vm343
        %v345 = vsel %vm344, %v336, %v341
        %v346 = vmul.f32 %v329, %v345
        %v347 = vperm.slane %v290, 1
        %v348 = vmul.f32 %v346, %v347
        %v349 = vperm.slane %v290, 2
        %v350 = vadd.f32 %v348, %v349
        %351 = vst.msk [vmem:[%s284] sm:$0xff] %vm292, %v350
        %s352 = sand.u32 %s127, 1
        %s353 = scalar_lea.sflag [#allocation4], %s352
        %s354 = sand.u32 %s127, 1
        %s355 = smul.addr %s354, 8
        %s356 = scalar_lea.vmem [#allocation10], %s355
        // Predicated region
        $region53: #{tpu_custom_call.1} parent=35 // pred_check
          %p357 = pneg %p137
        $region54: #{tpu_custom_call.1} parent=35 // pred_check_branch
          %359 = sbr.rel (%p357) target = $region56
        $region55: #{tpu_custom_call.1} parent=35 // pred_region
          %361 = vsyncadd %s353, 0
          %s362 = smul.addr %s25, 8
          %s363 = scalar_lea.hbm %s4, %s362
          %s365 = sshll.u32 %s356, 4
          %s366 = int_to_ptr.vmem [resolvable:$true] %s365
          %s367 = sshll.u32 %s363, 4
          %s368 = int_to_ptr.hbm [resolvable:$true] %s367
          %370 = dma.vmem_to_hbm [thread:$0]  %s366, 128, %s368, %s353
        $region56: #{tpu_custom_call.1} parent=35 // pred_fallthru
          _
      $region36: #{tpu_custom_call.1} parent=5 // pred_fallthru
        _
      %p371 = scmp.le.s32.totalorder 2, %s20
      // Predicated region
      $region57: #{tpu_custom_call.1} parent=5 // pred_check
        %p372 = pneg %p371
      $region58: #{tpu_custom_call.1} parent=5 // pred_check_branch
        %374 = sbr.rel (%p372) target = $region60
      $region59: #{tpu_custom_call.1} parent=5 // pred_region
        %s375 = ssub.s32 %s20, 2
        // Predicated region
        $region61: #{tpu_custom_call.1} parent=59 // pred_check
          %p376 = pneg %p143
        $region62: #{tpu_custom_call.1} parent=59 // pred_check_branch
          %378 = sbr.rel (%p376) target = $region64
        $region63: #{tpu_custom_call.1} parent=59 // pred_region
          %s379 = sand.u32 %s128, 1
          %s380 = scalar_lea.sflag [#allocation4], %s379
          %s381 = sand.u32 %s128, 1
          %s382 = smul.addr %s381, 8
          %s383 = scalar_lea.vmem [#allocation10], %s382
          %385 = dma.done %s380, 128
        $region64: #{tpu_custom_call.1} parent=59 // pred_fallthru
          _
      $region60: #{tpu_custom_call.1} parent=5 // pred_fallthru
        _
    $region6: #{tpu_custom_call.1} parent=1 // loop_footer
      %s24 = sadd.s32 1, %s20
    $region7: #{tpu_custom_call.1} parent=1 // loop_footer_branch
      %19 = sbr.rel target = $region3
    $region8: #{tpu_custom_call.1} parent=1 // loop_exit
      _
    %386 = vsyncpa [#allocation3], 1
    %s387 = scalar_lea.sflag [#allocation3], 1
    %388 = vsyncpa %s387, 1
    %389 = vsyncpa [#allocation6], 1
    %s390 = scalar_lea.sflag [#allocation6], 1
    %391 = vsyncpa %s390, 1
    %392 = vsyncpa [#allocation9], 1
    %393 = vsyncpa [#allocation4], 1
    %s394 = scalar_lea.sflag [#allocation4], 1
    %395 = vsyncpa %s394, 1

// kernel: tpu_custom_call.1
$region0: #{tpu_custom_call.1}
  #allocation0 [shape = 'u32[]', space=smem, size = 0x4, offset = 0x4, fixed_abs, tag = 'smem constant byte address 0x4 - core index']
  #allocation1 [shape = 'u32[72,128]{1,0:T(1,128)}', space=vmem, size = 0x9000, scoped, tag = 'internal scratch']
  %s0 = inlined_call_operand.hbm [shape: f32[16,32], index: 0, kind: input, shape index: {}]
  %s1 = inlined_call_operand.hbm [shape: f32[16,32], index: 1, kind: input, shape index: {}]
  %s2 = inlined_call_operand.hbm [shape: f32[32,32], index: 2, kind: input, shape index: {}]
  %s3 = inlined_call_operand.hbm [shape: f32[3,32], index: 3, kind: input, shape index: {}]
  %s4 = inlined_call_operand.hbm [shape: f32[16,32], index: 4, kind: output, shape index: {}]
  %s5 = sld [smem:[#allocation0]]
  $region65: #{tpu_custom_call.1} parent=0
    _
  %s7 = ssub.s32 1, %s5
  %s8 = scalar_select 0, %s7, %s5
  $region1: #{tpu_custom_call.1} parent=0
    #allocation2 [shape = 'u8[8192]{0}', space=vmem, size = 0x2000, scoped, tag = 'input window, operand 0']
    #allocation3 [shape = 's32[2]{0}', space=sflag, size = 0x8, scoped, tag = 'scoped memory for tpu_custom_call.1']
    #allocation4 [shape = 's32[2]{0}', space=sflag, size = 0x8, scoped, tag = 'scoped memory for tpu_custom_call.1']
    #allocation5 [shape = 'u8[8192]{0}', space=vmem, size = 0x2000, scoped, tag = 'input window, operand 1']
    #allocation6 [shape = 's32[2]{0}', space=sflag, size = 0x8, scoped, tag = 'scoped memory for tpu_custom_call.1']
    #allocation7 [shape = 'u8[16384]{0}', space=vmem, size = 0x4000, scoped, tag = 'input window, operand 2, single buffered']
    #allocation8 [shape = 'u8[2048]{0}', space=vmem, size = 0x800, scoped, tag = 'input window, operand 3, single buffered']
    #allocation9 [shape = 's32[1]{0}', space=sflag, size = 0x4, scoped, tag = 'scoped memory for tpu_custom_call.1']
    #allocation10 [shape = 'u8[8192]{0}', space=vmem, size = 0x2000, scoped, tag = 'output window, operand 0']
    %9 = vsyncpa [#allocation3], 0
    %s10 = scalar_lea.sflag [#allocation3], 1
    %11 = vsyncpa %s10, 0
    %12 = vsyncpa [#allocation6], 0
    %s13 = scalar_lea.sflag [#allocation6], 1
    %14 = vsyncpa %s13, 0
    %15 = vsyncpa [#allocation9], 0
    %16 = vsyncpa [#allocation4], 0
    %s17 = scalar_lea.sflag [#allocation4], 1
    %18 = vsyncpa %s17, 0
    loop: start=0, step=1, limit=4
    $region2: #{tpu_custom_call.1} parent=1 // loop_pre_header
      _
    $region3: #{tpu_custom_call.1} parent=1 // loop_header
      %s20 = sphi 0, %s24
      %p21 = scmp.ge.s32.totalorder %s20, 4
      %s30 = sphi 0, %s32
      %s33 = sphi 0, %s30
      %s34 = sphi 0, %s33
      %s50 = sphi 0, %s34
      %s56 = sphi 0, %s58
      %s59 = sphi 0, %s56
      %s60 = sphi 0, %s59
      %s76 = sphi 0, %s60
      %s80 = sphi 0, %s80
      %s82 = sphi 0, %s80
      %s83 = sphi 0, %s82
      %s97 = sphi 0, %s83
      %s101 = sphi 0, %s101
      %s103 = sphi 0, %s101
      %s104 = sphi 0, %s103
      %s118 = sphi 0, %s104
      %s124 = sphi 0, %s126
      %s127 = sphi 0, %s124
      %s128 = sphi 0, %s127
      %s144 = sphi 0, %s128
    $region4: #{tpu_custom_call.1} parent=1 // loop_header_branch
      %23 = sbr.rel (%p21) target = $region8
    $region5: #{tpu_custom_call.1} parent=1 // loop_body
      %s25 = ssub.s32 %s20, 1
      %s26 = ssub.s32 %s20, 2
      %s27 = sadd.s32 %s20, 1
      %s28 = ssub.s32 %s20, %s27
      %p29 = scmp.eq.s32.totalorder %s28, 0
      %s31 = sadd.s32 %s30, 1
      %s32 = scalar_select %p29, %s30, %s31
      %p35 = pneg %p29
      %p36 = scmp.eq.s32.totalorder %s20, 1
      %p37 = por %p35, %p36
      %p38 = scmp.ne.s32.totalorder %s30, %s33
      %p39 = scmp.eq.s32.totalorder %s20, 0
      %p40 = por %p38, %p39
      %p41 = scmp.ne.s32.totalorder %s30, %s33
      %p42 = scmp.eq.s32.totalorder %s25, 1
      %p43 = por %p41, %p42
      %p44 = scmp.ne.s32.totalorder %s33, %s34
      %p45 = scmp.eq.s32.totalorder %s25, 0
      %p46 = por %p44, %p45
      %p47 = scmp.ne.s32.totalorder %s33, %s34
      %p48 = scmp.eq.s32.totalorder %s26, 1
      %p49 = por %p47, %p48
      %p51 = scmp.ne.s32.totalorder %s34, %s50
      %p52 = scmp.eq.s32.totalorder %s26, 0
      %p53 = por %p51, %p52
      %s54 = ssub.s32 %s20, %s27
      %p55 = scmp.eq.s32.totalorder %s54, 0
      %s57 = sadd.s32 %s56, 1
      %s58 = scalar_select %p55, %s56, %s57
      %p61 = pneg %p55
      %p62 = scmp.eq.s32.totalorder %s20, 1
      %p63 = por %p61, %p62
      %p64 = scmp.ne.s32.totalorder %s56, %s59
      %p65 = scmp.eq.s32.totalorder %s20, 0
      %p66 = por %p64, %p65
      %p67 = scmp.ne.s32.totalorder %s56, %s59
      %p68 = scmp.eq.s32.totalorder %s25, 1
      %p69 = por %p67, %p68
      %p70 = scmp.ne.s32.totalorder %s59, %s60
      %p71 = scmp.eq.s32.totalorder %s25, 0
      %p72 = por %p70, %p71
      %p73 = scmp.ne.s32.totalorder %s59, %s60
      %p74 = scmp.eq.s32.totalorder %s26, 1
      %p75 = por %p73, %p74
      %p77 = scmp.ne.s32.totalorder %s60, %s76
      %p78 = scmp.eq.s32.totalorder %s26, 0
      %p79 = por %p77, %p78
      %s81 = sadd.s32 %s80, 1
      %p84 = scmp.eq.s32.totalorder %s20, 1
      %p85 = scmp.ne.s32.totalorder %s80, %s82
      %p86 = scmp.eq.s32.totalorder %s20, 0
      %p87 = por %p85, %p86
      %p88 = scmp.ne.s32.totalorder %s80, %s82
      %p89 = scmp.eq.s32.totalorder %s25, 1
      %p90 = por %p88, %p89
      %p91 = scmp.ne.s32.totalorder %s82, %s83
      %p92 = scmp.eq.s32.totalorder %s25, 0
      %p93 = por %p91, %p92
      %p94 = scmp.ne.s32.totalorder %s82, %s83
      %p95 = scmp.eq.s32.totalorder %s26, 1
      %p96 = por %p94, %p95
      %p98 = scmp.ne.s32.totalorder %s83, %s97
      %p99 = scmp.eq.s32.totalorder %s26, 0
      %p100 = por %p98, %p99
      %s102 = sadd.s32 %s101, 1
      %p105 = scmp.eq.s32.totalorder %s20, 1
      %p106 = scmp.ne.s32.totalorder %s101, %s103
      %p107 = scmp.eq.s32.totalorder %s20, 0
      %p108 = por %p106, %p107
      %p109 = scmp.ne.s32.totalorder %s101, %s103
      %p110 = scmp.eq.s32.totalorder %s25, 1
      %p111 = por %p109, %p110
      %p112 = scmp.ne.s32.totalorder %s103, %s104
      %p113 = scmp.eq.s32.totalorder %s25, 0
      %p114 = por %p112, %p113
      %p115 = scmp.ne.s32.totalorder %s103, %s104
      %p116 = scmp.eq.s32.totalorder %s26, 1
      %p117 = por %p115, %p116
      %p119 = scmp.ne.s32.totalorder %s104, %s118
      %p120 = scmp.eq.s32.totalorder %s26, 0
      %p121 = por %p119, %p120
      %s122 = ssub.s32 %s20, %s27
      %p123 = scmp.eq.s32.totalorder %s122, 0
      %s125 = sadd.s32 %s124, 1
      %s126 = scalar_select %p123, %s124, %s125
      %p129 = pneg %p123
      %p130 = scmp.eq.s32.totalorder %s20, 1
      %p131 = por %p129, %p130
      %p132 = scmp.ne.s32.totalorder %s124, %s127
      %p133 = scmp.eq.s32.totalorder %s20, 0
      %p134 = por %p132, %p133
      %p135 = scmp.ne.s32.totalorder %s124, %s127
      %p136 = scmp.eq.s32.totalorder %s25, 1
      %p137 = por %p135, %p136
      %p138 = scmp.ne.s32.totalorder %s127, %s128
      %p139 = scmp.eq.s32.totalorder %s25, 0
      %p140 = por %p138, %p139
      %p141 = scmp.ne.s32.totalorder %s127, %s128
      %p142 = scmp.eq.s32.totalorder %s26, 1
      %p143 = por %p141, %p142
      %p145 = scmp.ne.s32.totalorder %s128, %s144
      %p146 = scmp.eq.s32.totalorder %s26, 0
      %p147 = por %p145, %p146
      %p148 = scmp.le.s32.totalorder 1, %s20
      %p149 = scmp.lt.s32.totalorder %s20, 3
      %p150 = pnand %p148, %p149
      %p151 = pneg %p150
      // Predicated region
      $region9: #{tpu_custom_call.1} parent=5 // pred_check
        _
      $region10: #{tpu_custom_call.1} parent=5 // pred_check_branch
        %153 = sbr.rel (%p150) target = $region12
      $region11: #{tpu_custom_call.1} parent=5 // pred_region
        %s154 = ssub.s32 %s20, 1
        // Predicated region
        $region13: #{tpu_custom_call.1} parent=11 // pred_check
          %p155 = pneg %p93
        $region14: #{tpu_custom_call.1} parent=11 // pred_check_branch
          %157 = sbr.rel (%p155) target = $region16
        $region15: #{tpu_custom_call.1} parent=11 // pred_region
          %159 = vsyncadd [#allocation6], 0
          %s160 = sshll.u32 %s2, 4
          %s161 = int_to_ptr.hbm [resolvable:$true] %s160
          %s162 = sshll.u32 [#allocation7], 4
          %s163 = int_to_ptr.vmem [resolvable:$true] %s162
          %168 = dma.hbm_to_vmem [thread:$0]  %s161, 512, %s163, [#allocation6], 128, 128, 8
        $region16: #{tpu_custom_call.1} parent=11 // pred_fallthru
          _
        // Predicated region
        $region17: #{tpu_custom_call.1} parent=11 // pred_check
          %p169 = pneg %p114
        $region18: #{tpu_custom_call.1} parent=11 // pred_check_branch
          %171 = sbr.rel (%p169) target = $region20
        $region19: #{tpu_custom_call.1} parent=11 // pred_region
          %173 = vsyncadd [#allocation9], 0
          %s175 = sshll.u32 %s3, 4
          %s176 = int_to_ptr.hbm [resolvable:$true] %s175
          %s177 = sshll.u32 [#allocation8], 4
          %s178 = int_to_ptr.vmem [resolvable:$true] %s177
          %180 = dma.hbm_to_vmem [thread:$0]  %s176, 64, %s178, [#allocation9]
        $region20: #{tpu_custom_call.1} parent=11 // pred_fallthru
          _
      $region12: #{tpu_custom_call.1} parent=5 // pred_fallthru
        _
      %p181 = scmp.lt.s32.totalorder %s20, 2
      // Predicated region
      $region21: #{tpu_custom_call.1} parent=5 // pred_check
        %p182 = pneg %p181
      $region22: #{tpu_custom_call.1} parent=5 // pred_check_branch
        %184 = sbr.rel (%p182) target = $region24
      $region23: #{tpu_custom_call.1} parent=5 // pred_region
        // Predicated region
        $region25: #{tpu_custom_call.1} parent=23 // pred_check
          %p185 = pneg %p40
        $region26: #{tpu_custom_call.1} parent=23 // pred_check_branch
          %187 = sbr.rel (%p185) target = $region28
        $region27: #{tpu_custom_call.1} parent=23 // pred_region
          %s188 = sand.u32 %s30, 1
          %s189 = scalar_lea.sflag [#allocation3], %s188
          %s190 = sand.u32 %s30, 1
          %s191 = smul.addr %s190, 8
          %s192 = scalar_lea.vmem [#allocation2], %s191
          %194 = vsyncadd %s189, 0
          %s195 = smul.addr %s20, 8
          %s196 = scalar_lea.hbm %s0, %s195
          %s198 = sshll.u32 %s196, 4
          %s199 = int_to_ptr.hbm [resolvable:$true] %s198
          %s200 = sshll.u32 %s192, 4
          %s201 = int_to_ptr.vmem [resolvable:$true] %s200
          %203 = dma.hbm_to_vmem [thread:$0]  %s199, 128, %s201, %s189
        $region28: #{tpu_custom_call.1} parent=23 // pred_fallthru
          _
        // Predicated region
        $region29: #{tpu_custom_call.1} parent=23 // pred_check
          %p204 = pneg %p66
        $region30: #{tpu_custom_call.1} parent=23 // pred_check_branch
          %206 = sbr.rel (%p204) target = $region32
        $region31: #{tpu_custom_call.1} parent=23 // pred_region
          %s207 = sand.u32 %s20, 1
          %s208 = scalar_lea.sflag [#allocation6], %s207
          %s209 = sand.u32 %s56, 1
          %s210 = smul.addr %s209, 8
          %s211 = scalar_lea.vmem [#allocation5], %s210
          %213 = vsyncadd %s208, 0
          %s214 = smul.addr %s20, 8
          %s215 = scalar_lea.hbm %s1, %s214
          %s217 = sshll.u32 %s215, 4
          %s218 = int_to_ptr.hbm [resolvable:$true] %s217
          %s219 = sshll.u32 %s211, 4
          %s220 = int_to_ptr.vmem [resolvable:$true] %s219
          %222 = dma.hbm_to_vmem [thread:$0]  %s218, 128, %s220, %s208
        $region32: #{tpu_custom_call.1} parent=23 // pred_fallthru
          _
      $region24: #{tpu_custom_call.1} parent=5 // pred_fallthru
        _
      %p223 = scmp.le.s32.totalorder 1, %s20
      %p224 = scmp.lt.s32.totalorder %s20, 3
      %p225 = pnand %p223, %p224
      %p226 = pneg %p225
      // Predicated region
      $region33: #{tpu_custom_call.1} parent=5 // pred_check
        _
      $region34: #{tpu_custom_call.1} parent=5 // pred_check_branch
        %228 = sbr.rel (%p225) target = $region36
      $region35: #{tpu_custom_call.1} parent=5 // pred_region
        %s229 = ssub.s32 %s20, 1
        %s230 = sand.u32 %s33, 1
        %s231 = scalar_lea.sflag [#allocation3], %s230
        %s232 = sand.u32 %s33, 1
        %s233 = smul.addr %s232, 8
        %s234 = scalar_lea.vmem [#allocation2], %s233
        // Predicated region
        $region37: #{tpu_custom_call.1} parent=35 // pred_check
          %p235 = pneg %p46
        $region38: #{tpu_custom_call.1} parent=35 // pred_check_branch
          %237 = sbr.rel (%p235) target = $region40
        $region39: #{tpu_custom_call.1} parent=35 // pred_region
          %239 = dma.done %s231, 128
        $region40: #{tpu_custom_call.1} parent=35 // pred_fallthru
          _
        %s240 = sand.u32 %s25, 1
        %s241 = scalar_lea.sflag [#allocation6], %s240
        %s242 = sand.u32 %s59, 1
        %s243 = smul.addr %s242, 8
        %s244 = scalar_lea.vmem [#allocation5], %s243
        // Predicated region
        $region41: #{tpu_custom_call.1} parent=35 // pred_check
          %p245 = pneg %p72
        $region42: #{tpu_custom_call.1} parent=35 // pred_check_branch
          %247 = sbr.rel (%p245) target = $region44
        $region43: #{tpu_custom_call.1} parent=35 // pred_region
          %249 = dma.done %s241, 128
        $region44: #{tpu_custom_call.1} parent=35 // pred_fallthru
          _
        // Predicated region
        $region45: #{tpu_custom_call.1} parent=35 // pred_check
          %p250 = pneg %p93
        $region46: #{tpu_custom_call.1} parent=35 // pred_check_branch
          %252 = sbr.rel (%p250) target = $region48
        $region47: #{tpu_custom_call.1} parent=35 // pred_region
          %254 = dma.done [#allocation6], 512
        $region48: #{tpu_custom_call.1} parent=35 // pred_fallthru
          _
        // Predicated region
        $region49: #{tpu_custom_call.1} parent=35 // pred_check
          %p255 = pneg %p114
        $region50: #{tpu_custom_call.1} parent=35 // pred_check_branch
          %257 = sbr.rel (%p255) target = $region52
        $region51: #{tpu_custom_call.1} parent=35 // pred_region
          %259 = dma.done [#allocation9], 64
        $region52: #{tpu_custom_call.1} parent=35 // pred_fallthru
          _
        %s260 = sand.u32 %s33, 1
        %s261 = scalar_lea.sflag [#allocation3], %s260
        %s262 = sand.u32 %s33, 1
        %s263 = smul.addr %s262, 8
        %s264 = scalar_lea.vmem [#allocation2], %s263
        %p265 = pneg %p46
        %p266 = pneg %p43
        %s267 = sand.u32 %s25, 1
        %s268 = scalar_lea.sflag [#allocation6], %s267
        %s269 = sand.u32 %s59, 1
        %s270 = smul.addr %s269, 8
        %s271 = scalar_lea.vmem [#allocation5], %s270
        %p272 = pneg %p72
        %p273 = pneg %p69
        %p274 = pneg %p93
        %p275 = pneg %p90
        %p276 = pneg %p114
        %p277 = pneg %p111
        %p278 = pneg %p140
        %p279 = pneg %p137
        %s280 = sand.u32 %s127, 1
        %s281 = scalar_lea.sflag [#allocation4], %s280
        %s282 = sand.u32 %s127, 1
        %s283 = smul.addr %s282, 8
        %s284 = scalar_lea.vmem [#allocation10], %s283
        %v285 = vld [vmem:[#allocation7] sm:$0xff]
        %v286 = vld [vmem:[#allocation7 + $0x8] sm:$0xff]
        %v287 = vld [vmem:[#allocation7 + $0x10] sm:$0xff]
        %v288 = vld [vmem:[#allocation7 + $0x18] sm:$0xff]
        %v289 = vld [vmem:[%s234] sm:$0xff]
        %v290 = vld [vmem:[#allocation8] sm:$0x7]
        %v291 = vperm.slane %v290, 0
        %vm292 = vcmask 261120
        %v294 = vsel %vm292, %v289, 0
        %296 = vmatpush.msra.mxu0 0.0
        %297 = vmatpush.msra.mxu0 0.0
        %298 = vmatpush.msra.mxu0 0.0
        %299 = vmatpush.msra.mxu0 0.0
        %300 = vmatpush.msra.mxu0 0.0
        %301 = vmatpush.msra.mxu0 0.0
        %302 = vmatpush.msra.mxu0 0.0
        %303 = vmatpush.msra.mxu0 0.0
        %304 = vmatpush.msra.mxu0 0.0
        %305 = vmatpush.msra.mxu0 0.0
        %306 = vmatpush.msra.mxu0 0.0
        %307 = vmatpush.msra.mxu0 0.0
        %308 = vmatpush.msra.mxu0 %v288
        %309 = vmatpush.msra.mxu0 %v287
        %310 = vmatpush.msra.mxu0 %v286
        %311 = vmatpush.msra.mxu0 %v285
        %312 = vmatmul.f32.gmra.mxu0 %v294
        %v313 = vpop.f32.mrf.mxu0
        %v314 = vadd.f32 %v291, %v313
        %315 = vdwg.mxu0
        %v316 = vld [vmem:[%s244] sm:$0xff]
        %v317 = vadd.f32 %v314, %v316
        %v318 = vsel %vm292, %v317, 0.0
        %319 = vadd.xlane.f32.xlu0 %v318
        %v320 = vpop.xlane.xlu0 %319
        %v321 = vrcp.pop 32.0
        %v322 = vmul.f32 32.0, %v321
        %v323 = vsub.f32 1.0, %v322
        %v324 = vmul.f32 %v321, %v323
        %v325 = vadd.f32 %v321, %v324
        %vm326 = vweird.f32 %v321
        %v327 = vsel %vm326, %v321, %v325
        %v328 = vmul.f32 %v320, %v327
        %v329 = vsub.f32 %v317, %v328
        %v330 = vmul.f32 %v329, %v329
        %v331 = vsel %vm292, %v330, 0.0
        %332 = vadd.xlane.f32.xlu0 %v331
        %v333 = vpop.xlane.xlu0 %332
        %v334 = vmul.f32 %v333, %v327
        %v335 = vadd.f32 %v334, 1e-12
        %v336 = vrsqrt.pop %v335
        %v337 = vmul.f32 %v336, %v335
        %v338 = vmul.f32 %v337, %v336
        %v339 = vmul.f32 0.5, %v338
        %v340 = vsub.f32 1.5, %v339
        %v341 = vmul.f32 %v336, %v340
        %vm342 = vweird.f32 %v335
        %vm343 = vweird.f32 %v336
        %vm344 = vmor %vm342, %vm343
        %v345 = vsel %vm344, %v336, %v341
        %v346 = vmul.f32 %v329, %v345
        %v347 = vperm.slane %v290, 1
        %v348 = vmul.f32 %v346, %v347
        %v349 = vperm.slane %v290, 2
        %v350 = vadd.f32 %v348, %v349
        %351 = vst.msk [vmem:[%s284] sm:$0xff] %vm292, %v350
        %s352 = sand.u32 %s127, 1
        %s353 = scalar_lea.sflag [#allocation4], %s352
        %s354 = sand.u32 %s127, 1
        %s355 = smul.addr %s354, 8
        %s356 = scalar_lea.vmem [#allocation10], %s355
        // Predicated region
        $region53: #{tpu_custom_call.1} parent=35 // pred_check
          %p357 = pneg %p137
        $region54: #{tpu_custom_call.1} parent=35 // pred_check_branch
          %359 = sbr.rel (%p357) target = $region56
        $region55: #{tpu_custom_call.1} parent=35 // pred_region
          %361 = vsyncadd %s353, 0
          %s362 = smul.addr %s25, 8
          %s363 = scalar_lea.hbm %s4, %s362
          %s365 = sshll.u32 %s356, 4
          %s366 = int_to_ptr.vmem [resolvable:$true] %s365
          %s367 = sshll.u32 %s363, 4
          %s368 = int_to_ptr.hbm [resolvable:$true] %s367
          %370 = dma.vmem_to_hbm [thread:$0]  %s366, 128, %s368, %s353
        $region56: #{tpu_custom_call.1} parent=35 // pred_fallthru
          _
      $region36: #{tpu_custom_call.1} parent=5 // pred_fallthru
        _
      %p371 = scmp.le.s32.totalorder 2, %s20
      // Predicated region
      $region57: #{tpu_custom_call.1} parent=5 // pred_check
        %p372 = pneg %p371
      $region58: #{tpu_custom_call.1} parent=5 // pred_check_branch
        %374 = sbr.rel (%p372) target = $region60
      $region59: #{tpu_custom_call.1} parent=5 // pred_region
        %s375 = ssub.s32 %s20, 2
        // Predicated region
        $region61: #{tpu_custom_call.1} parent=59 // pred_check
          %p376 = pneg %p143
        $region62: #{tpu_custom_call.1} parent=59 // pred_check_branch
          %378 = sbr.rel (%p376) target = $region64
        $region63: #{tpu_custom_call.1} parent=59 // pred_region
          %s379 = sand.u32 %s128, 1
          %s380 = scalar_lea.sflag [#allocation4], %s379
          %s381 = sand.u32 %s128, 1
          %s382 = smul.addr %s381, 8
          %s383 = scalar_lea.vmem [#allocation10], %s382
          %385 = dma.done %s380, 128
        $region64: #{tpu_custom_call.1} parent=59 // pred_fallthru
          _
      $region60: #{tpu_custom_call.1} parent=5 // pred_fallthru
        _
    $region6: #{tpu_custom_call.1} parent=1 // loop_footer
      %s24 = sadd.s32 1, %s20
    $region7: #{tpu_custom_call.1} parent=1 // loop_footer_branch
      %19 = sbr.rel target = $region3
    $region8: #{tpu_custom_call.1} parent=1 // loop_exit
      _
    %386 = vsyncpa [#allocation3], 1
    %s387 = scalar_lea.sflag [#allocation3], 1
    %388 = vsyncpa %s387, 1
    %389 = vsyncpa [#allocation6], 1
    %s390 = scalar_lea.sflag [#allocation6], 1
    %391 = vsyncpa %s390, 1
    %392 = vsyncpa [#allocation9], 1
    %393 = vsyncpa [#allocation4], 1
    %s394 = scalar_lea.sflag [#allocation4], 1
    %395 = vsyncpa %s394, 1

</llo_original>
